<compile_context>
chip_gen: v7x
topology: tpu7x:2x2x1
jax: 0.10.0
libtpu: 0.0.40
codegen_flags: <defaults>
</compile_context>

<pallas_src>
import jax
import jax.numpy as jnp
from jax.experimental import pallas as pl
from jax.experimental.pallas import tpu as pltpu

_MAX_INFLIGHT_DMAS = 4          # concurrent HBM->HBM DMA descriptors
_MIN_BYTES_PER_CHUNK = 1 << 20  # don't split below ~1 MiB per DMA


def _chunk_bounds(lead: int, total_bytes: int):
    """Static (start, size) pairs covering [0, lead) with <= _MAX_INFLIGHT_DMAS chunks."""
    if lead <= 1 or total_bytes < 2 * _MIN_BYTES_PER_CHUNK:
        return [(0, lead)]
    num = min(_MAX_INFLIGHT_DMAS, lead,
              max(1, total_bytes // _MIN_BYTES_PER_CHUNK))
    base, rem = divmod(lead, num)
    bounds, start = [], 0
    for c in range(num):
        size = base + (1 if c < rem else 0)
        bounds.append((start, size))
        start += size
    return bounds


def identity(x: jax.Array) -> jax.Array:
    """Pallas implementation of Identity.forward: returns x unchanged.

    The cheapest correct implementation is simply `return x` (PyTorch's
    Identity returns the same tensor).  The Pallas kernel below produces a
    fresh output buffer at DMA-roofline cost: direct HBM->HBM copies with no
    VMEM staging and no per-tile pipeline overhead.
    """
    orig_shape = x.shape
    if x.ndim == 0:
        x = x.reshape((1,))
    if x.size == 0:
        # Nothing to copy; an empty DMA is pointless.
        return x.reshape(orig_shape)

    total_bytes = x.size * jnp.dtype(x.dtype).itemsize
    bounds = _chunk_bounds(x.shape[0], total_bytes)
    num_chunks = len(bounds)

    def kernel(x_hbm_ref, o_hbm_ref, sems):
        # Issue all chunk DMAs (overlapping), then wait on all of them.
        copies = []
        for c, (start, size) in enumerate(bounds):
            if num_chunks == 1:
                src, dst = x_hbm_ref, o_hbm_ref
            else:
                # Static leading-axis slices on HBM refs: contiguous regions.
                src = x_hbm_ref.at[pl.ds(start, size)]
                dst = o_hbm_ref.at[pl.ds(start, size)]
            cp = pltpu.make_async_copy(src, dst, sems.at[c])
            cp.start()
            copies.append(cp)
        for cp in copies:
            cp.wait()

    out = pl.pallas_call(
        kernel,
        out_shape=jax.ShapeDtypeStruct(x.shape, x.dtype),
        in_specs=[pl.BlockSpec(memory_space=pl.ANY)],
        out_specs=pl.BlockSpec(memory_space=pl.ANY),
        scratch_shapes=[pltpu.SemaphoreType.DMA((num_chunks,))],
    )(x)

    return out.reshape(orig_shape)


if __name__ == "__main__":
    key = jax.random.PRNGKey(0)
    # Small NCHW input consistent with typical module usage: (batch=2, C=4, H=16, W=16)
    x = jax.random.normal(key, (2, 4, 16, 16), dtype=jnp.float32)

    y = identity(x)
    jax.block_until_ready(y)

    assert y.shape == x.shape and y.dtype == x.dtype
    assert bool(jnp.array_equal(y, x))
    print("KERNEL_OK")
</pallas_src>

<mosaic_0001>
module attributes {stable_mosaic.version = 11 : i64} {
  func.func @kernel(%arg0: memref<2x4x16x16xf32, #tpu.memory_space<any>>, %arg1: memref<2x4x16x16xf32, #tpu.memory_space<any>>, %arg2: memref<1x!tpu.dma_semaphore, #tpu.memory_space<semaphore_mem>>) attributes {dimension_semantics = [], scalar_prefetch = 0 : i64, scratch_operands = 1 : i64, tpu.core_type = #tpu.core_type<tc>} {
    %c0_i32 = arith.constant 0 : i32
    %0 = tpu.memref_slice %arg2[%c0_i32] : memref<1x!tpu.dma_semaphore, #tpu.memory_space<semaphore_mem>> -> memref<1x!tpu.dma_semaphore, #tpu.memory_space<semaphore_mem>>
    %1 = tpu.memref_squeeze %0 : memref<1x!tpu.dma_semaphore, #tpu.memory_space<semaphore_mem>> -> memref<!tpu.dma_semaphore, #tpu.memory_space<semaphore_mem>>
    tpu.enqueue_dma source(%arg0 : memref<2x4x16x16xf32, #tpu.memory_space<any>>) target(%arg1 : memref<2x4x16x16xf32, #tpu.memory_space<any>>) target_semaphore(%1 : memref<!tpu.dma_semaphore, #tpu.memory_space<semaphore_mem>>)
    %c0_i32_0 = arith.constant 0 : i32
    %2 = tpu.memref_slice %arg2[%c0_i32_0] : memref<1x!tpu.dma_semaphore, #tpu.memory_space<semaphore_mem>> -> memref<1x!tpu.dma_semaphore, #tpu.memory_space<semaphore_mem>>
    %3 = tpu.memref_squeeze %2 : memref<1x!tpu.dma_semaphore, #tpu.memory_space<semaphore_mem>> -> memref<!tpu.dma_semaphore, #tpu.memory_space<semaphore_mem>>
    tpu.wait_dma2 semaphore(%3 : memref<!tpu.dma_semaphore, #tpu.memory_space<semaphore_mem>>) src(%arg0 : memref<2x4x16x16xf32, #tpu.memory_space<any>>) dst(%arg1 : memref<2x4x16x16xf32, #tpu.memory_space<any>>)
    return
  }
}

</mosaic_0001>

<llo_original>
// kernel: tpu_custom_call.1
$region0: #{tpu_custom_call.1}
  #allocation0 [shape = 'u32[]', space=smem, size = 0x4, offset = 0x4, fixed_abs, tag = 'smem constant byte address 0x4 - core index']
  #allocation1 [shape = 'u32[144,128]{1,0:T(1,128)}', space=vmem, size = 0x12000, scoped, tag = 'internal scratch']
  #allocation2 [shape = 's32[1]{0}', space=sflag, size = 0x4, scoped, tag = 'scratch operand']
  #allocation3 [shape = 's32[]', space=sflag, size = 0x4, offset = 0, fixed_abs, tag = 'sflag constant byte address 0x0 - dummy sync flag']
  #allocation4 [shape = 'u32[0]{0}', space=smem, size = 0, offset = 0, fixed_abs, tag = 'smem constant byte address 0x0 - null']
  %s0 = inlined_call_operand.hbm [shape: f32[2,4,16,16], index: 0, kind: input, shape index: {}]
  %s1 = inlined_call_operand.hbm [shape: f32[2,4,16,16], index: 1, kind: output, shape index: {}]
  %s2 = sld [smem:[#allocation0]]
  $region2: #{tpu_custom_call.1} parent=0
    _
  %s4 = ssub.s32 1, %s2
  %s5 = scalar_select 0, %s4, %s2
  %s7 = sshll.u32 1, 14
  %s8 = sxor.u32 4294967295, %s7
  %s11 = sshll.u32 3, 24
  %s12 = sxor.u32 4294967295, %s11
  %s13 = sand.u32 0, %s12
  %s15 = sor.u32 %s13, 0
  %18 = dma.general %s0, 2048, %s1, [#allocation2], [#allocation3], [#allocation4], %s15, 0
  %s19 = smul.u32 2, 4
  %s20 = smul.u32 %s19, 16
  %s21 = smul.u32 %s20, 1
  %s22 = sshll.u32 %s21, 4
  %23 = dma.done [#allocation2], %s22
  %24 = vsyncmov [#allocation2]
  %s25 = vpop.sfrf %24
  %p26 = scmp.eq.s32.totalorder %s25, 0
  %p27 = pneg %p26
  %29 = shalt.err (%p27)

</llo_original>
